<compile_context>
chip_gen: v6e
topology: v6e:2x2x1
jax: 0.10.0
libtpu: 0.0.40
codegen_flags: <defaults>
</compile_context>

<pallas_src>
import functools

import jax
import jax.numpy as jnp
from jax.experimental import pallas as pl
from jax.experimental.pallas import tpu as pltpu


def _round_up(x: int, m: int) -> int:
    return ((x + m - 1) // m) * m


def _mlp_feature_kernel(
    x_ref,
    w1_ref, b1_ref,
    w2_ref, b2_ref,
    w3_ref, b3_ref,
    w4_ref, b4_ref,
    fused_ref,
    *,
    h_pad: int,
):
    """Fused 4-layer MLP: (Linear+ReLU) x3 -> Linear.

    Writes one lane-dense slab: [:, :h_pad] = feature, [:, h_pad:] = out.
    Matmuls accumulate in f32; bias-add / ReLU epilogue stays in f32.
    """
    dot_dtype = w1_ref.dtype                       # f32 or bf16 compute dtype
    x = x_ref[...]

    h = jnp.dot(x, w1_ref[...], preferred_element_type=jnp.float32) + b1_ref[...]
    h = jnp.maximum(h, 0.0)                        # relu1 (f32)

    h = jnp.dot(h.astype(dot_dtype), w2_ref[...],
                preferred_element_type=jnp.float32) + b2_ref[...]
    h = jnp.maximum(h, 0.0)                        # relu2 (f32)

    h = jnp.dot(h.astype(dot_dtype), w3_ref[...],
                preferred_element_type=jnp.float32) + b3_ref[...]
    feature = jnp.maximum(h, 0.0)                  # relu3 -> feature (f32)

    out = jnp.dot(feature.astype(dot_dtype), w4_ref[...],
                  preferred_element_type=jnp.float32) + b4_ref[...]

    # Single fused, lane-dense output slab; both slices are 128-lane aligned.
    fused_ref[:, :h_pad] = feature.astype(fused_ref.dtype)
    fused_ref[:, h_pad:] = out.astype(fused_ref.dtype)


def _pick_batch_tile(b: int, tile_b: int) -> tuple[int, int]:
    """Choose a sublane-aligned batch tile that balances work across grid
    steps and minimizes padded rows.  Returns (tile, padded_batch)."""
    b8 = _round_up(max(b, 1), 8)
    if b8 <= tile_b:
        return b8, b8
    n_steps = pl.cdiv(b8, tile_b)
    tile = _round_up(pl.cdiv(b8, n_steps), 8)
    return tile, tile * pl.cdiv(b8, tile)


@functools.partial(jax.jit, static_argnames=("compute_dtype", "tile_b"))
def mlp_feature_forward(x, params, *, compute_dtype=jnp.float32, tile_b=256):
    """x: (B, ...).  Returns (feature (B, hidden_dim), out (B, output_dim))."""
    b = x.shape[0]
    x2d = x.reshape(b, -1).astype(jnp.float32)     # == x.view(x.size(0), -1)

    (w1, b1), (w2, b2), (w3, b3), (w4, b4) = params
    input_dim = x2d.shape[1]
    hidden_dim = w3.shape[1]
    output_dim = w4.shape[1]

    # Lane-dense padding (multiples of 128) — padded weight/bias lanes are
    # zero, so results are exact for the un-padded columns.
    k_pad = _round_up(input_dim, 128)
    h_pad = _round_up(hidden_dim, 128)
    o_pad = _round_up(output_dim, 128)

    tile, b_pad = _pick_batch_tile(b, int(tile_b))
    grid = (b_pad // tile,)

    cd = compute_dtype
    xp = jnp.zeros((b_pad, k_pad), cd).at[:b, :input_dim].set(x2d.astype(cd))
    w1p = jnp.zeros((k_pad, h_pad), cd).at[:input_dim, :hidden_dim].set(w1.astype(cd))
    w2p = jnp.zeros((h_pad, h_pad), cd).at[:hidden_dim, :hidden_dim].set(w2.astype(cd))
    w3p = jnp.zeros((h_pad, h_pad), cd).at[:hidden_dim, :hidden_dim].set(w3.astype(cd))
    w4p = jnp.zeros((h_pad, o_pad), cd).at[:hidden_dim, :output_dim].set(w4.astype(cd))
    # Biases stay f32 (epilogue runs in f32 on every chip generation).
    b1p = jnp.zeros((1, h_pad), jnp.float32).at[:, :hidden_dim].set(b1.astype(jnp.float32))
    b2p = jnp.zeros((1, h_pad), jnp.float32).at[:, :hidden_dim].set(b2.astype(jnp.float32))
    b3p = jnp.zeros((1, h_pad), jnp.float32).at[:, :hidden_dim].set(b3.astype(jnp.float32))
    b4p = jnp.zeros((1, o_pad), jnp.float32).at[:, :output_dim].set(b4.astype(jnp.float32))

    # Weights/biases: same block every grid step -> stay VMEM-resident
    # (fetched once, never re-DMA'd across batch tiles).
    w_spec = lambda shape: pl.BlockSpec(shape, lambda i: (0, 0))

    itemsize = jnp.dtype(cd).itemsize
    flops = 2 * b_pad * (k_pad * h_pad + 2 * h_pad * h_pad + h_pad * o_pad)
    bytes_accessed = (
        b_pad * k_pad * itemsize                                    # x
        + (k_pad * h_pad + 2 * h_pad * h_pad + h_pad * o_pad) * itemsize  # weights
        + (3 * h_pad + o_pad) * 4                                   # biases (f32)
        + b_pad * (h_pad + o_pad) * 4                               # fused output
    )

    fused = pl.pallas_call(
        functools.partial(_mlp_feature_kernel, h_pad=h_pad),
        out_shape=jax.ShapeDtypeStruct((b_pad, h_pad + o_pad), jnp.float32),
        grid=grid,
        in_specs=[
            pl.BlockSpec((tile, k_pad), lambda i: (i, 0)),   # x tile (pipelined)
            w_spec((k_pad, h_pad)), w_spec((1, h_pad)),      # fc1
            w_spec((h_pad, h_pad)), w_spec((1, h_pad)),      # fc2
            w_spec((h_pad, h_pad)), w_spec((1, h_pad)),      # fc3
            w_spec((h_pad, o_pad)), w_spec((1, o_pad)),      # fc4
        ],
        out_specs=pl.BlockSpec((tile, h_pad + o_pad), lambda i: (i, 0)),
        compiler_params=pltpu.CompilerParams(
            dimension_semantics=("parallel",),               # megacore / v7x
            vmem_limit_bytes=64 * 1024 * 1024,
        ),
        cost_estimate=pl.CostEstimate(
            flops=flops, transcendentals=0, bytes_accessed=bytes_accessed),
    )(xp, w1p, b1p, w2p, b2p, w3p, b3p, w4p, b4p)

    feature = fused[:b, :hidden_dim]
    out = fused[:b, h_pad:h_pad + output_dim]
    return feature, out


def init_mlp_feature_params(key, input_dim, hidden_dim, output_dim):
    """Deterministic init mimicking torch.nn.Linear default U(-k, k), k=1/sqrt(fan_in).

    Weights stored as (in_features, out_features); biases as (1, out_features).
    """
    dims = [(input_dim, hidden_dim),
            (hidden_dim, hidden_dim),
            (hidden_dim, hidden_dim),
            (hidden_dim, output_dim)]
    params = []
    for (fan_in, fan_out) in dims:
        key, kw, kb = jax.random.split(key, 3)
        bound = 1.0 / jnp.sqrt(float(fan_in))
        w = jax.random.uniform(kw, (fan_in, fan_out), jnp.float32, -bound, bound)
        bias = jax.random.uniform(kb, (1, fan_out), jnp.float32, -bound, bound)
        params.append((w, bias))
    return tuple(params)


if __name__ == "__main__":
    key = jax.random.PRNGKey(0)

    # Small shapes consistent with the module: batch=8 samples of flattened
    # dimension 64 (a (8, 4, 4, 4) input viewed as (8, 64)).
    batch, input_dim, hidden_dim, output_dim = 8, 64, 32, 10

    key, kx = jax.random.split(key)
    x = jax.random.normal(kx, (batch, 4, 4, 4), jnp.float32)  # flattened in wrapper

    params = init_mlp_feature_params(key, input_dim, hidden_dim, output_dim)

    # Plain-JAX reference of the same math.
    x2d = x.reshape(batch, -1)
    (w1, b1), (w2, b2), (w3, b3), (w4, b4) = params
    h = jnp.maximum(x2d @ w1 + b1, 0.0)
    h = jnp.maximum(h @ w2 + b2, 0.0)
    feat_ref = jnp.maximum(h @ w3 + b3, 0.0)
    out_ref = feat_ref @ w4 + b4

    # f32 path (exact, default).
    feature, out = mlp_feature_forward(x, params)
    jax.block_until_ready((feature, out))
    assert feature.shape == (batch, hidden_dim) and out.shape == (batch, output_dim)
    assert jnp.allclose(feature, feat_ref, atol=1e-5, rtol=1e-5)
    assert jnp.allclose(out, out_ref, atol=1e-5, rtol=1e-5)

    # bf16 weights/activations path (v6e/v7x-friendly), f32 accumulation.
    feature_bf, out_bf = mlp_feature_forward(x, params, compute_dtype=jnp.bfloat16)
    jax.block_until_ready((feature_bf, out_bf))
    assert jnp.allclose(feature_bf, feat_ref, atol=1e-1, rtol=1e-1)
    assert jnp.allclose(out_bf, out_ref, atol=1e-1, rtol=1e-1)

    print("KERNEL_OK")
</pallas_src>

<mosaic_0001>
module attributes {stable_mosaic.version = 11 : i64} {
  func.func @_mlp_feature_kernel(%arg0: i32, %arg1: memref<8x128xf32, #tpu.memory_space<vmem>>, %arg2: memref<128x128xf32, #tpu.memory_space<vmem>>, %arg3: memref<1x128xf32, #tpu.memory_space<vmem>>, %arg4: memref<128x128xf32, #tpu.memory_space<vmem>>, %arg5: memref<1x128xf32, #tpu.memory_space<vmem>>, %arg6: memref<128x128xf32, #tpu.memory_space<vmem>>, %arg7: memref<1x128xf32, #tpu.memory_space<vmem>>, %arg8: memref<128x128xf32, #tpu.memory_space<vmem>>, %arg9: memref<1x128xf32, #tpu.memory_space<vmem>>, %arg10: memref<8x256xf32, #tpu.memory_space<vmem>>) attributes {dimension_semantics = [#tpu.dimension_semantics<parallel>], iteration_bounds = array<i64: 1>, scalar_prefetch = 0 : i64, scratch_operands = 0 : i64, tpu.core_type = #tpu.core_type<tc>, window_params = [{transform_indices = @transform_0, window_bounds = array<i64: 8, 128>}, {pipeline_mode = #tpu.pipeline_mode<synchronous>, transform_indices = @transform_1, window_bounds = array<i64: 128, 128>}, {pipeline_mode = #tpu.pipeline_mode<synchronous>, transform_indices = @transform_2, window_bounds = array<i64: 1, 128>}, {pipeline_mode = #tpu.pipeline_mode<synchronous>, transform_indices = @transform_3, window_bounds = array<i64: 128, 128>}, {pipeline_mode = #tpu.pipeline_mode<synchronous>, transform_indices = @transform_4, window_bounds = array<i64: 1, 128>}, {pipeline_mode = #tpu.pipeline_mode<synchronous>, transform_indices = @transform_5, window_bounds = array<i64: 128, 128>}, {pipeline_mode = #tpu.pipeline_mode<synchronous>, transform_indices = @transform_6, window_bounds = array<i64: 1, 128>}, {pipeline_mode = #tpu.pipeline_mode<synchronous>, transform_indices = @transform_7, window_bounds = array<i64: 128, 128>}, {pipeline_mode = #tpu.pipeline_mode<synchronous>, transform_indices = @transform_8, window_bounds = array<i64: 1, 128>}, {transform_indices = @transform_9, window_bounds = array<i64: 8, 256>}]} {
    %c0 = arith.constant 0 : index
    %c0_0 = arith.constant 0 : index
    %0 = vector.load %arg1[%c0, %c0_0] : memref<8x128xf32, #tpu.memory_space<vmem>>, vector<8x128xf32>
    %c0_1 = arith.constant 0 : index
    %c0_2 = arith.constant 0 : index
    %1 = vector.load %arg2[%c0_1, %c0_2] : memref<128x128xf32, #tpu.memory_space<vmem>>, vector<128x128xf32>
    %cst = arith.constant dense<0.000000e+00> : vector<8x128xf32>
    %2 = tpu.matmul %0, %1, %cst {dimension_numbers = #tpu.dot_dimension_numbers<[1], [0], [0], [1], [0, 0, 1, 1], [], []>} : vector<8x128xf32>, vector<128x128xf32>, vector<8x128xf32> -> vector<8x128xf32>
    %c0_3 = arith.constant 0 : index
    %c0_4 = arith.constant 0 : index
    %3 = vector.load %arg3[%c0_3, %c0_4] : memref<1x128xf32, #tpu.memory_space<vmem>>, vector<1x128xf32>
    %4 = vector.broadcast %3 : vector<1x128xf32> to vector<8x128xf32>
    %5 = arith.addf %2, %4 : vector<8x128xf32>
    %cst_5 = arith.constant 0.000000e+00 : f32
    %6 = vector.broadcast %cst_5 : f32 to vector<8x128xf32>
    %7 = arith.maximumf %5, %6 : vector<8x128xf32>
    %c0_6 = arith.constant 0 : index
    %c0_7 = arith.constant 0 : index
    %8 = vector.load %arg4[%c0_6, %c0_7] : memref<128x128xf32, #tpu.memory_space<vmem>>, vector<128x128xf32>
    %cst_8 = arith.constant dense<0.000000e+00> : vector<8x128xf32>
    %9 = tpu.matmul %7, %8, %cst_8 {dimension_numbers = #tpu.dot_dimension_numbers<[1], [0], [0], [1], [0, 0, 1, 1], [], []>} : vector<8x128xf32>, vector<128x128xf32>, vector<8x128xf32> -> vector<8x128xf32>
    %c0_9 = arith.constant 0 : index
    %c0_10 = arith.constant 0 : index
    %10 = vector.load %arg5[%c0_9, %c0_10] : memref<1x128xf32, #tpu.memory_space<vmem>>, vector<1x128xf32>
    %11 = vector.broadcast %10 : vector<1x128xf32> to vector<8x128xf32>
    %12 = arith.addf %9, %11 : vector<8x128xf32>
    %cst_11 = arith.constant 0.000000e+00 : f32
    %13 = vector.broadcast %cst_11 : f32 to vector<8x128xf32>
    %14 = arith.maximumf %12, %13 : vector<8x128xf32>
    %c0_12 = arith.constant 0 : index
    %c0_13 = arith.constant 0 : index
    %15 = vector.load %arg6[%c0_12, %c0_13] : memref<128x128xf32, #tpu.memory_space<vmem>>, vector<128x128xf32>
    %cst_14 = arith.constant dense<0.000000e+00> : vector<8x128xf32>
    %16 = tpu.matmul %14, %15, %cst_14 {dimension_numbers = #tpu.dot_dimension_numbers<[1], [0], [0], [1], [0, 0, 1, 1], [], []>} : vector<8x128xf32>, vector<128x128xf32>, vector<8x128xf32> -> vector<8x128xf32>
    %c0_15 = arith.constant 0 : index
    %c0_16 = arith.constant 0 : index
    %17 = vector.load %arg7[%c0_15, %c0_16] : memref<1x128xf32, #tpu.memory_space<vmem>>, vector<1x128xf32>
    %18 = vector.broadcast %17 : vector<1x128xf32> to vector<8x128xf32>
    %19 = arith.addf %16, %18 : vector<8x128xf32>
    %cst_17 = arith.constant 0.000000e+00 : f32
    %20 = vector.broadcast %cst_17 : f32 to vector<8x128xf32>
    %21 = arith.maximumf %19, %20 : vector<8x128xf32>
    %c0_18 = arith.constant 0 : index
    %c0_19 = arith.constant 0 : index
    %22 = vector.load %arg8[%c0_18, %c0_19] : memref<128x128xf32, #tpu.memory_space<vmem>>, vector<128x128xf32>
    %cst_20 = arith.constant dense<0.000000e+00> : vector<8x128xf32>
    %23 = tpu.matmul %21, %22, %cst_20 {dimension_numbers = #tpu.dot_dimension_numbers<[1], [0], [0], [1], [0, 0, 1, 1], [], []>} : vector<8x128xf32>, vector<128x128xf32>, vector<8x128xf32> -> vector<8x128xf32>
    %c0_21 = arith.constant 0 : index
    %c0_22 = arith.constant 0 : index
    %24 = vector.load %arg9[%c0_21, %c0_22] : memref<1x128xf32, #tpu.memory_space<vmem>>, vector<1x128xf32>
    %25 = vector.broadcast %24 : vector<1x128xf32> to vector<8x128xf32>
    %26 = arith.addf %23, %25 : vector<8x128xf32>
    %c0_23 = arith.constant 0 : index
    %c0_24 = arith.constant 0 : index
    %27 = vector.load %arg10[%c0_23, %c0_24] : memref<8x256xf32, #tpu.memory_space<vmem>>, vector<8x128xf32>
    tpu.vector_store %arg10[%c0_23, %c0_24], %21 {strides = array<i32>} : memref<8x256xf32, #tpu.memory_space<vmem>>, vector<8x128xf32>,
    %c0_25 = arith.constant 0 : index
    %c128 = arith.constant 128 : index
    %28 = vector.load %arg10[%c0_25, %c128] : memref<8x256xf32, #tpu.memory_space<vmem>>, vector<8x128xf32>
    tpu.vector_store %arg10[%c0_25, %c128], %26 {strides = array<i32>} : memref<8x256xf32, #tpu.memory_space<vmem>>, vector<8x128xf32>,
    return
  }
  func.func @transform_0(%arg0: i32) -> (i32, i32) {
    %c0_i32 = arith.constant 0 : i32
    %c0_i32_0 = arith.constant 0 : i32
    return %arg0, %c0_i32 : i32, i32
  }
  func.func @transform_1(%arg0: i32) -> (i32, i32) {
    %c0_i32 = arith.constant 0 : i32
    %c0_i32_0 = arith.constant 0 : i32
    %c0_i32_1 = arith.constant 0 : i32
    return %c0_i32, %c0_i32_0 : i32, i32
  }
  func.func @transform_2(%arg0: i32) -> (i32, i32) {
    %c0_i32 = arith.constant 0 : i32
    %c0_i32_0 = arith.constant 0 : i32
    %c0_i32_1 = arith.constant 0 : i32
    return %c0_i32, %c0_i32_0 : i32, i32
  }
  func.func @transform_3(%arg0: i32) -> (i32, i32) {
    %c0_i32 = arith.constant 0 : i32
    %c0_i32_0 = arith.constant 0 : i32
    %c0_i32_1 = arith.constant 0 : i32
    return %c0_i32, %c0_i32_0 : i32, i32
  }
  func.func @transform_4(%arg0: i32) -> (i32, i32) {
    %c0_i32 = arith.constant 0 : i32
    %c0_i32_0 = arith.constant 0 : i32
    %c0_i32_1 = arith.constant 0 : i32
    return %c0_i32, %c0_i32_0 : i32, i32
  }
  func.func @transform_5(%arg0: i32) -> (i32, i32) {
    %c0_i32 = arith.constant 0 : i32
    %c0_i32_0 = arith.constant 0 : i32
    %c0_i32_1 = arith.constant 0 : i32
    return %c0_i32, %c0_i32_0 : i32, i32
  }
  func.func @transform_6(%arg0: i32) -> (i32, i32) {
    %c0_i32 = arith.constant 0 : i32
    %c0_i32_0 = arith.constant 0 : i32
    %c0_i32_1 = arith.constant 0 : i32
    return %c0_i32, %c0_i32_0 : i32, i32
  }
  func.func @transform_7(%arg0: i32) -> (i32, i32) {
    %c0_i32 = arith.constant 0 : i32
    %c0_i32_0 = arith.constant 0 : i32
    %c0_i32_1 = arith.constant 0 : i32
    return %c0_i32, %c0_i32_0 : i32, i32
  }
  func.func @transform_8(%arg0: i32) -> (i32, i32) {
    %c0_i32 = arith.constant 0 : i32
    %c0_i32_0 = arith.constant 0 : i32
    %c0_i32_1 = arith.constant 0 : i32
    return %c0_i32, %c0_i32_0 : i32, i32
  }
  func.func @transform_9(%arg0: i32) -> (i32, i32) {
    %c0_i32 = arith.constant 0 : i32
    %c0_i32_0 = arith.constant 0 : i32
    return %arg0, %c0_i32 : i32, i32
  }
}

</mosaic_0001>

<llo_original>
// kernel: mlp_feature_forward.1
$region0: #{mlp_feature_forward.1}
  #allocation0 [shape = 'u32[]', space=smem, size = 0x4, offset = 0x4, fixed_abs, tag = 'smem constant byte address 0x4 - core index']
  #allocation1 [shape = 'u32[144,128]{1,0:T(1,128)}', space=vmem, size = 0x12000, scoped, tag = 'internal scratch']
  %s0 = inlined_call_operand.vmem [shape: f32[8,128], index: 0, kind: input, shape index: {}]
  %s1 = inlined_call_operand.vmem [shape: f32[128,128], index: 1, kind: input, shape index: {}]
  %s2 = inlined_call_operand.vmem [shape: f32[1,128], index: 2, kind: input, shape index: {}]
  %s3 = inlined_call_operand.vmem [shape: f32[128,128], index: 3, kind: input, shape index: {}]
  %s4 = inlined_call_operand.vmem [shape: f32[1,128], index: 4, kind: input, shape index: {}]
  %s5 = inlined_call_operand.vmem [shape: f32[128,128], index: 5, kind: input, shape index: {}]
  %s6 = inlined_call_operand.vmem [shape: f32[1,128], index: 6, kind: input, shape index: {}]
  %s7 = inlined_call_operand.vmem [shape: f32[128,128], index: 7, kind: input, shape index: {}]
  %s8 = inlined_call_operand.vmem [shape: f32[1,128], index: 8, kind: input, shape index: {}]
  %s9 = inlined_call_operand.vmem [shape: f32[8,256], index: 9, kind: output, shape index: {}]
  %s10 = sld [smem:[#allocation0]]
  $region46: #{mlp_feature_forward.1} parent=0
    _
  %s12 = ssub.s32 1, %s10
  %s13 = scalar_select 0, %s12, %s10
  // Predicated region
  $region2: #{mlp_feature_forward.1} parent=0 // pred_check
    _
  $region3: #{mlp_feature_forward.1} parent=0 // pred_check_branch
    %15 = sbr.rel (0) target = $region5
  $region4: #{mlp_feature_forward.1} parent=0 // pred_region
    _
  $region5: #{mlp_feature_forward.1} parent=0 // pred_fallthru
    _
  // Predicated region
  $region6: #{mlp_feature_forward.1} parent=0 // pred_check
    _
  $region7: #{mlp_feature_forward.1} parent=0 // pred_check_branch
    %17 = sbr.rel (0) target = $region9
  $region8: #{mlp_feature_forward.1} parent=0 // pred_region
    _
  $region9: #{mlp_feature_forward.1} parent=0 // pred_fallthru
    _
  // Predicated region
  $region10: #{mlp_feature_forward.1} parent=0 // pred_check
    _
  $region11: #{mlp_feature_forward.1} parent=0 // pred_check_branch
    %19 = sbr.rel (0) target = $region13
  $region12: #{mlp_feature_forward.1} parent=0 // pred_region
    _
  $region13: #{mlp_feature_forward.1} parent=0 // pred_fallthru
    _
  // Predicated region
  $region14: #{mlp_feature_forward.1} parent=0 // pred_check
    _
  $region15: #{mlp_feature_forward.1} parent=0 // pred_check_branch
    %21 = sbr.rel (0) target = $region17
  $region16: #{mlp_feature_forward.1} parent=0 // pred_region
    _
  $region17: #{mlp_feature_forward.1} parent=0 // pred_fallthru
    _
  // Predicated region
  $region18: #{mlp_feature_forward.1} parent=0 // pred_check
    _
  $region19: #{mlp_feature_forward.1} parent=0 // pred_check_branch
    %23 = sbr.rel (0) target = $region21
  $region20: #{mlp_feature_forward.1} parent=0 // pred_region
    _
  $region21: #{mlp_feature_forward.1} parent=0 // pred_fallthru
    _
  // Predicated region
  $region22: #{mlp_feature_forward.1} parent=0 // pred_check
    _
  $region23: #{mlp_feature_forward.1} parent=0 // pred_check_branch
    %25 = sbr.rel (0) target = $region25
  $region24: #{mlp_feature_forward.1} parent=0 // pred_region
    _
  $region25: #{mlp_feature_forward.1} parent=0 // pred_fallthru
    _
  // Predicated region
  $region26: #{mlp_feature_forward.1} parent=0 // pred_check
    _
  $region27: #{mlp_feature_forward.1} parent=0 // pred_check_branch
    %27 = sbr.rel (0) target = $region29
  $region28: #{mlp_feature_forward.1} parent=0 // pred_region
    _
  $region29: #{mlp_feature_forward.1} parent=0 // pred_fallthru
    _
  // Predicated region
  $region30: #{mlp_feature_forward.1} parent=0 // pred_check
    _
  $region31: #{mlp_feature_forward.1} parent=0 // pred_check_branch
    %29 = sbr.rel (0) target = $region33
  $region32: #{mlp_feature_forward.1} parent=0 // pred_region
    _
  $region33: #{mlp_feature_forward.1} parent=0 // pred_fallthru
    _
  // Predicated region
  $region34: #{mlp_feature_forward.1} parent=0 // pred_check
    _
  $region35: #{mlp_feature_forward.1} parent=0 // pred_check_branch
    %31 = sbr.rel (0) target = $region37
  $region36: #{mlp_feature_forward.1} parent=0 // pred_region
    _
  $region37: #{mlp_feature_forward.1} parent=0 // pred_fallthru
    _
  %v32 = vld [vmem:[%s0] sm:$0xff]
  %v33 = vld [vmem:[%s1] sm:$0xff]
  %v34 = vld [vmem:[%s1 + $0x8] sm:$0xff]
  %v35 = vld [vmem:[%s1 + $0x10] sm:$0xff]
  %v36 = vld [vmem:[%s1 + $0x18] sm:$0xff]
  %v37 = vld [vmem:[%s1 + $0x20] sm:$0xff]
  %v38 = vld [vmem:[%s1 + $0x28] sm:$0xff]
  %v39 = vld [vmem:[%s1 + $0x30] sm:$0xff]
  %v40 = vld [vmem:[%s1 + $0x38] sm:$0xff]
  %v41 = vld [vmem:[%s1 + $0x40] sm:$0xff]
  %v42 = vld [vmem:[%s1 + $0x48] sm:$0xff]
  %v43 = vld [vmem:[%s1 + $0x50] sm:$0xff]
  %v44 = vld [vmem:[%s1 + $0x58] sm:$0xff]
  %v45 = vld [vmem:[%s1 + $0x60] sm:$0xff]
  %v46 = vld [vmem:[%s1 + $0x68] sm:$0xff]
  %v47 = vld [vmem:[%s1 + $0x70] sm:$0xff]
  %v48 = vld [vmem:[%s1 + $0x78] sm:$0xff]
  %v49 = vld [vmem:[%s2] sm:$0x1]
  %v51 = vlaneseq
  %v52 = vshrl.u32 %v51, 7
  %v53 = vsub.s32 0, %v52
  %v54 = vrot.slane %v49, %v53
  %56 = vmatprep.subr.mxu0 0.0
  %57 = vmatpush1.msra.mxu0 %v48
  %58 = vmatprep.subr.mxu0 0.0
  %59 = vmatpush1.msra.mxu0 %v47
  %60 = vmatprep.subr.mxu0 0.0
  %61 = vmatpush1.msra.mxu0 %v46
  %62 = vmatprep.subr.mxu0 0.0
  %63 = vmatpush1.msra.mxu0 %v45
  %64 = vmatprep.subr.mxu0 0.0
  %65 = vmatpush1.msra.mxu0 %v44
  %66 = vmatprep.subr.mxu0 0.0
  %67 = vmatpush1.msra.mxu0 %v43
  %68 = vmatprep.subr.mxu0 0.0
  %69 = vmatpush1.msra.mxu0 %v42
  %70 = vmatprep.subr.mxu0 0.0
  %71 = vmatpush1.msra.mxu0 %v41
  %72 = vmatprep.subr.mxu0 0.0
  %73 = vmatpush1.msra.mxu0 %v40
  %74 = vmatprep.subr.mxu0 0.0
  %75 = vmatpush1.msra.mxu0 %v39
  %76 = vmatprep.subr.mxu0 0.0
  %77 = vmatpush1.msra.mxu0 %v38
  %78 = vmatprep.subr.mxu0 0.0
  %79 = vmatpush1.msra.mxu0 %v37
  %80 = vmatprep.subr.mxu0 0.0
  %81 = vmatpush1.msra.mxu0 %v36
  %82 = vmatprep.subr.mxu0 0.0
  %83 = vmatpush1.msra.mxu0 %v35
  %84 = vmatprep.subr.mxu0 0.0
  %85 = vmatpush1.msra.mxu0 %v34
  %86 = vmatprep.subr.mxu0 0.0
  %87 = vmatpush1.msra.mxu0 %v33
  %88 = vmatprep.subr.mxu0 0.0
  %89 = vmatpush2.msra.mxu0 0.0
  %90 = vmatprep.subr.mxu0 0.0
  %91 = vmatpush2.msra.mxu0 0.0
  %92 = vmatprep.subr.mxu0 0.0
  %93 = vmatpush2.msra.mxu0 0.0
  %94 = vmatprep.subr.mxu0 0.0
  %95 = vmatpush2.msra.mxu0 0.0
  %96 = vmatprep.subr.mxu0 0.0
  %97 = vmatpush2.msra.mxu0 0.0
  %98 = vmatprep.subr.mxu0 0.0
  %99 = vmatpush2.msra.mxu0 0.0
  %100 = vmatprep.subr.mxu0 0.0
  %101 = vmatpush2.msra.mxu0 0.0
  %102 = vmatprep.subr.mxu0 0.0
  %103 = vmatpush2.msra.mxu0 0.0
  %104 = vmatprep.subr.mxu0 0.0
  %105 = vmatpush2.msra.mxu0 0.0
  %106 = vmatprep.subr.mxu0 0.0
  %107 = vmatpush2.msra.mxu0 0.0
  %108 = vmatprep.subr.mxu0 0.0
  %109 = vmatpush2.msra.mxu0 0.0
  %110 = vmatprep.subr.mxu0 0.0
  %111 = vmatpush2.msra.mxu0 0.0
  %112 = vmatprep.subr.mxu0 0.0
  %113 = vmatpush2.msra.mxu0 0.0
  %114 = vmatprep.subr.mxu0 0.0
  %115 = vmatpush2.msra.mxu0 0.0
  %116 = vmatprep.subr.mxu0 0.0
  %117 = vmatpush2.msra.mxu0 0.0
  %118 = vmatprep.subr.mxu0 0.0
  %119 = vmatpush2.msra.mxu0 0.0
  %120 = vmatprep.mubr.f32.mxu0 0.0
  %121 = vmatmul.mubr.f32.gmra.mxu0 %v32
  %v122 = vpop.f32.mrf.mxu0
  %v123 = vadd.f32 %v54, %v122
  %v124 = vpop.f32.mrf.mxu0
  %125 = vdwg.mxu0
  %v126 = vmax.f32 %v123, 0.0
  %v127 = vld [vmem:[%s3] sm:$0xff]
  %v128 = vld [vmem:[%s3 + $0x8] sm:$0xff]
  %v129 = vld [vmem:[%s3 + $0x10] sm:$0xff]
  %v130 = vld [vmem:[%s3 + $0x18] sm:$0xff]
  %v131 = vld [vmem:[%s3 + $0x20] sm:$0xff]
  %v132 = vld [vmem:[%s3 + $0x28] sm:$0xff]
  %v133 = vld [vmem:[%s3 + $0x30] sm:$0xff]
  %v134 = vld [vmem:[%s3 + $0x38] sm:$0xff]
  %v135 = vld [vmem:[%s3 + $0x40] sm:$0xff]
  %v136 = vld [vmem:[%s3 + $0x48] sm:$0xff]
  %v137 = vld [vmem:[%s3 + $0x50] sm:$0xff]
  %v138 = vld [vmem:[%s3 + $0x58] sm:$0xff]
  %v139 = vld [vmem:[%s3 + $0x60] sm:$0xff]
  %v140 = vld [vmem:[%s3 + $0x68] sm:$0xff]
  %v141 = vld [vmem:[%s3 + $0x70] sm:$0xff]
  %v142 = vld [vmem:[%s3 + $0x78] sm:$0xff]
  %v143 = vld [vmem:[%s4] sm:$0x1]
  %v145 = vlaneseq
  %v146 = vshrl.u32 %v145, 7
  %v147 = vsub.s32 0, %v146
  %v148 = vrot.slane %v143, %v147
  %150 = vmatprep.subr.mxu0 0.0
  %151 = vmatpush1.msra.mxu0 %v142
  %152 = vmatprep.subr.mxu0 0.0
  %153 = vmatpush1.msra.mxu0 %v141
  %154 = vmatprep.subr.mxu0 0.0
  %155 = vmatpush1.msra.mxu0 %v140
  %156 = vmatprep.subr.mxu0 0.0
  %157 = vmatpush1.msra.mxu0 %v139
  %158 = vmatprep.subr.mxu0 0.0
  %159 = vmatpush1.msra.mxu0 %v138
  %160 = vmatprep.subr.mxu0 0.0
  %161 = vmatpush1.msra.mxu0 %v137
  %162 = vmatprep.subr.mxu0 0.0
  %163 = vmatpush1.msra.mxu0 %v136
  %164 = vmatprep.subr.mxu0 0.0
  %165 = vmatpush1.msra.mxu0 %v135
  %166 = vmatprep.subr.mxu0 0.0
  %167 = vmatpush1.msra.mxu0 %v134
  %168 = vmatprep.subr.mxu0 0.0
  %169 = vmatpush1.msra.mxu0 %v133
  %170 = vmatprep.subr.mxu0 0.0
  %171 = vmatpush1.msra.mxu0 %v132
  %172 = vmatprep.subr.mxu0 0.0
  %173 = vmatpush1.msra.mxu0 %v131
  %174 = vmatprep.subr.mxu0 0.0
  %175 = vmatpush1.msra.mxu0 %v130
  %176 = vmatprep.subr.mxu0 0.0
  %177 = vmatpush1.msra.mxu0 %v129
  %178 = vmatprep.subr.mxu0 0.0
  %179 = vmatpush1.msra.mxu0 %v128
  %180 = vmatprep.subr.mxu0 0.0
  %181 = vmatpush1.msra.mxu0 %v127
  %182 = vmatprep.subr.mxu0 0.0
  %183 = vmatpush2.msra.mxu0 0.0
  %184 = vmatprep.subr.mxu0 0.0
  %185 = vmatpush2.msra.mxu0 0.0
  %186 = vmatprep.subr.mxu0 0.0
  %187 = vmatpush2.msra.mxu0 0.0
  %188 = vmatprep.subr.mxu0 0.0
  %189 = vmatpush2.msra.mxu0 0.0
  %190 = vmatprep.subr.mxu0 0.0
  %191 = vmatpush2.msra.mxu0 0.0
  %192 = vmatprep.subr.mxu0 0.0
  %193 = vmatpush2.msra.mxu0 0.0
  %194 = vmatprep.subr.mxu0 0.0
  %195 = vmatpush2.msra.mxu0 0.0
  %196 = vmatprep.subr.mxu0 0.0
  %197 = vmatpush2.msra.mxu0 0.0
  %198 = vmatprep.subr.mxu0 0.0
  %199 = vmatpush2.msra.mxu0 0.0
  %200 = vmatprep.subr.mxu0 0.0
  %201 = vmatpush2.msra.mxu0 0.0
  %202 = vmatprep.subr.mxu0 0.0
  %203 = vmatpush2.msra.mxu0 0.0
  %204 = vmatprep.subr.mxu0 0.0
  %205 = vmatpush2.msra.mxu0 0.0
  %206 = vmatprep.subr.mxu0 0.0
  %207 = vmatpush2.msra.mxu0 0.0
  %208 = vmatprep.subr.mxu0 0.0
  %209 = vmatpush2.msra.mxu0 0.0
  %210 = vmatprep.subr.mxu0 0.0
  %211 = vmatpush2.msra.mxu0 0.0
  %212 = vmatprep.subr.mxu0 0.0
  %213 = vmatpush2.msra.mxu0 0.0
  %214 = vmatprep.mubr.f32.mxu0 0.0
  %215 = vmatmul.mubr.f32.gmra.mxu0 %v126
  %v216 = vpop.f32.mrf.mxu0
  %v217 = vadd.f32 %v148, %v216
  %v218 = vpop.f32.mrf.mxu0
  %219 = vdwg.mxu0
  %v220 = vmax.f32 %v217, 0.0
  %v221 = vld [vmem:[%s5] sm:$0xff]
  %v222 = vld [vmem:[%s5 + $0x8] sm:$0xff]
  %v223 = vld [vmem:[%s5 + $0x10] sm:$0xff]
  %v224 = vld [vmem:[%s5 + $0x18] sm:$0xff]
  %v225 = vld [vmem:[%s5 + $0x20] sm:$0xff]
  %v226 = vld [vmem:[%s5 + $0x28] sm:$0xff]
  %v227 = vld [vmem:[%s5 + $0x30] sm:$0xff]
  %v228 = vld [vmem:[%s5 + $0x38] sm:$0xff]
  %v229 = vld [vmem:[%s5 + $0x40] sm:$0xff]
  %v230 = vld [vmem:[%s5 + $0x48] sm:$0xff]
  %v231 = vld [vmem:[%s5 + $0x50] sm:$0xff]
  %v232 = vld [vmem:[%s5 + $0x58] sm:$0xff]
  %v233 = vld [vmem:[%s5 + $0x60] sm:$0xff]
  %v234 = vld [vmem:[%s5 + $0x68] sm:$0xff]
  %v235 = vld [vmem:[%s5 + $0x70] sm:$0xff]
  %v236 = vld [vmem:[%s5 + $0x78] sm:$0xff]
  %v237 = vld [vmem:[%s6] sm:$0x1]
  %v239 = vlaneseq
  %v240 = vshrl.u32 %v239, 7
  %v241 = vsub.s32 0, %v240
  %v242 = vrot.slane %v237, %v241
  %244 = vmatprep.subr.mxu0 0.0
  %245 = vmatpush1.msra.mxu0 %v236
  %246 = vmatprep.subr.mxu0 0.0
  %247 = vmatpush1.msra.mxu0 %v235
  %248 = vmatprep.subr.mxu0 0.0
  %249 = vmatpush1.msra.mxu0 %v234
  %250 = vmatprep.subr.mxu0 0.0
  %251 = vmatpush1.msra.mxu0 %v233
  %252 = vmatprep.subr.mxu0 0.0
  %253 = vmatpush1.msra.mxu0 %v232
  %254 = vmatprep.subr.mxu0 0.0
  %255 = vmatpush1.msra.mxu0 %v231
  %256 = vmatprep.subr.mxu0 0.0
  %257 = vmatpush1.msra.mxu0 %v230
  %258 = vmatprep.subr.mxu0 0.0
  %259 = vmatpush1.msra.mxu0 %v229
  %260 = vmatprep.subr.mxu0 0.0
  %261 = vmatpush1.msra.mxu0 %v228
  %262 = vmatprep.subr.mxu0 0.0
  %263 = vmatpush1.msra.mxu0 %v227
  %264 = vmatprep.subr.mxu0 0.0
  %265 = vmatpush1.msra.mxu0 %v226
  %266 = vmatprep.subr.mxu0 0.0
  %267 = vmatpush1.msra.mxu0 %v225
  %268 = vmatprep.subr.mxu0 0.0
  %269 = vmatpush1.msra.mxu0 %v224
  %270 = vmatprep.subr.mxu0 0.0
  %271 = vmatpush1.msra.mxu0 %v223
  %272 = vmatprep.subr.mxu0 0.0
  %273 = vmatpush1.msra.mxu0 %v222
  %274 = vmatprep.subr.mxu0 0.0
  %275 = vmatpush1.msra.mxu0 %v221
  %276 = vmatprep.subr.mxu0 0.0
  %277 = vmatpush2.msra.mxu0 0.0
  %278 = vmatprep.subr.mxu0 0.0
  %279 = vmatpush2.msra.mxu0 0.0
  %280 = vmatprep.subr.mxu0 0.0
  %281 = vmatpush2.msra.mxu0 0.0
  %282 = vmatprep.subr.mxu0 0.0
  %283 = vmatpush2.msra.mxu0 0.0
  %284 = vmatprep.subr.mxu0 0.0
  %285 = vmatpush2.msra.mxu0 0.0
  %286 = vmatprep.subr.mxu0 0.0
  %287 = vmatpush2.msra.mxu0 0.0
  %288 = vmatprep.subr.mxu0 0.0
  %289 = vmatpush2.msra.mxu0 0.0
  %290 = vmatprep.subr.mxu0 0.0
  %291 = vmatpush2.msra.mxu0 0.0
  %292 = vmatprep.subr.mxu0 0.0
  %293 = vmatpush2.msra.mxu0 0.0
  %294 = vmatprep.subr.mxu0 0.0
  %295 = vmatpush2.msra.mxu0 0.0
  %296 = vmatprep.subr.mxu0 0.0
  %297 = vmatpush2.msra.mxu0 0.0
  %298 = vmatprep.subr.mxu0 0.0
  %299 = vmatpush2.msra.mxu0 0.0
  %300 = vmatprep.subr.mxu0 0.0
  %301 = vmatpush2.msra.mxu0 0.0
  %302 = vmatprep.subr.mxu0 0.0
  %303 = vmatpush2.msra.mxu0 0.0
  %304 = vmatprep.subr.mxu0 0.0
  %305 = vmatpush2.msra.mxu0 0.0
  %306 = vmatprep.subr.mxu0 0.0
  %307 = vmatpush2.msra.mxu0 0.0
  %308 = vmatprep.mubr.f32.mxu0 0.0
  %309 = vmatmul.mubr.f32.gmra.mxu0 %v220
  %v310 = vpop.f32.mrf.mxu0
  %v311 = vadd.f32 %v242, %v310
  %v312 = vpop.f32.mrf.mxu0
  %313 = vdwg.mxu0
  %v314 = vmax.f32 %v311, 0.0
  %v315 = vld [vmem:[%s7] sm:$0xff]
  %v316 = vld [vmem:[%s7 + $0x8] sm:$0xff]
  %v317 = vld [vmem:[%s7 + $0x10] sm:$0xff]
  %v318 = vld [vmem:[%s7 + $0x18] sm:$0xff]
  %v319 = vld [vmem:[%s7 + $0x20] sm:$0xff]
  %v320 = vld [vmem:[%s7 + $0x28] sm:$0xff]
  %v321 = vld [vmem:[%s7 + $0x30] sm:$0xff]
  %v322 = vld [vmem:[%s7 + $0x38] sm:$0xff]
  %v323 = vld [vmem:[%s7 + $0x40] sm:$0xff]
  %v324 = vld [vmem:[%s7 + $0x48] sm:$0xff]
  %v325 = vld [vmem:[%s7 + $0x50] sm:$0xff]
  %v326 = vld [vmem:[%s7 + $0x58] sm:$0xff]
  %v327 = vld [vmem:[%s7 + $0x60] sm:$0xff]
  %v328 = vld [vmem:[%s7 + $0x68] sm:$0xff]
  %v329 = vld [vmem:[%s7 + $0x70] sm:$0xff]
  %v330 = vld [vmem:[%s7 + $0x78] sm:$0xff]
  %v331 = vld [vmem:[%s8] sm:$0x1]
  %v333 = vlaneseq
  %v334 = vshrl.u32 %v333, 7
  %v335 = vsub.s32 0, %v334
  %v336 = vrot.slane %v331, %v335
  %338 = vmatprep.subr.mxu0 0.0
  %339 = vmatpush1.msra.mxu0 %v330
  %340 = vmatprep.subr.mxu0 0.0
  %341 = vmatpush1.msra.mxu0 %v329
  %342 = vmatprep.subr.mxu0 0.0
  %343 = vmatpush1.msra.mxu0 %v328
  %344 = vmatprep.subr.mxu0 0.0
  %345 = vmatpush1.msra.mxu0 %v327
  %346 = vmatprep.subr.mxu0 0.0
  %347 = vmatpush1.msra.mxu0 %v326
  %348 = vmatprep.subr.mxu0 0.0
  %349 = vmatpush1.msra.mxu0 %v325
  %350 = vmatprep.subr.mxu0 0.0
  %351 = vmatpush1.msra.mxu0 %v324
  %352 = vmatprep.subr.mxu0 0.0
  %353 = vmatpush1.msra.mxu0 %v323
  %354 = vmatprep.subr.mxu0 0.0
  %355 = vmatpush1.msra.mxu0 %v322
  %356 = vmatprep.subr.mxu0 0.0
  %357 = vmatpush1.msra.mxu0 %v321
  %358 = vmatprep.subr.mxu0 0.0
  %359 = vmatpush1.msra.mxu0 %v320
  %360 = vmatprep.subr.mxu0 0.0
  %361 = vmatpush1.msra.mxu0 %v319
  %362 = vmatprep.subr.mxu0 0.0
  %363 = vmatpush1.msra.mxu0 %v318
  %364 = vmatprep.subr.mxu0 0.0
  %365 = vmatpush1.msra.mxu0 %v317
  %366 = vmatprep.subr.mxu0 0.0
  %367 = vmatpush1.msra.mxu0 %v316
  %368 = vmatprep.subr.mxu0 0.0
  %369 = vmatpush1.msra.mxu0 %v315
  %370 = vmatprep.subr.mxu0 0.0
  %371 = vmatpush2.msra.mxu0 0.0
  %372 = vmatprep.subr.mxu0 0.0
  %373 = vmatpush2.msra.mxu0 0.0
  %374 = vmatprep.subr.mxu0 0.0
  %375 = vmatpush2.msra.mxu0 0.0
  %376 = vmatprep.subr.mxu0 0.0
  %377 = vmatpush2.msra.mxu0 0.0
  %378 = vmatprep.subr.mxu0 0.0
  %379 = vmatpush2.msra.mxu0 0.0
  %380 = vmatprep.subr.mxu0 0.0
  %381 = vmatpush2.msra.mxu0 0.0
  %382 = vmatprep.subr.mxu0 0.0
  %383 = vmatpush2.msra.mxu0 0.0
  %384 = vmatprep.subr.mxu0 0.0
  %385 = vmatpush2.msra.mxu0 0.0
  %386 = vmatprep.subr.mxu0 0.0
  %387 = vmatpush2.msra.mxu0 0.0
  %388 = vmatprep.subr.mxu0 0.0
  %389 = vmatpush2.msra.mxu0 0.0
  %390 = vmatprep.subr.mxu0 0.0
  %391 = vmatpush2.msra.mxu0 0.0
  %392 = vmatprep.subr.mxu0 0.0
  %393 = vmatpush2.msra.mxu0 0.0
  %394 = vmatprep.subr.mxu0 0.0
  %395 = vmatpush2.msra.mxu0 0.0
  %396 = vmatprep.subr.mxu0 0.0
  %397 = vmatpush2.msra.mxu0 0.0
  %398 = vmatprep.subr.mxu0 0.0
  %399 = vmatpush2.msra.mxu0 0.0
  %400 = vmatprep.subr.mxu0 0.0
  %401 = vmatpush2.msra.mxu0 0.0
  %402 = vmatprep.mubr.f32.mxu0 0.0
  %403 = vmatmul.mubr.f32.gmra.mxu0 %v314
  %v404 = vpop.f32.mrf.mxu0
  %v405 = vadd.f32 %v336, %v404
  %v406 = vpop.f32.mrf.mxu0
  %407 = vdwg.mxu0
  %408 = vst [vmem:[%s9] sm:$0xff] %v314
  %409 = vst [vmem:[%s9 + $0x8] sm:$0xff] %v405
  // Predicated region
  $region38: #{mlp_feature_forward.1} parent=0 // pred_check
    _
  $region39: #{mlp_feature_forward.1} parent=0 // pred_check_branch
    %411 = sbr.rel (0) target = $region41
  $region40: #{mlp_feature_forward.1} parent=0 // pred_region
    _
  $region41: #{mlp_feature_forward.1} parent=0 // pred_fallthru
    _
  // Predicated region
  $region42: #{mlp_feature_forward.1} parent=0 // pred_check
    _
  $region43: #{mlp_feature_forward.1} parent=0 // pred_check_branch
    %413 = sbr.rel (0) target = $region45
  $region44: #{mlp_feature_forward.1} parent=0 // pred_region
    _
  $region45: #{mlp_feature_forward.1} parent=0 // pred_fallthru
    _

</llo_original>
